<compile_context>
chip_gen: v7x
topology: tpu7x:2x2x1
jax: 0.10.0
libtpu: 0.0.40
codegen_flags: <defaults>
</compile_context>

<pallas_src>
import jax
import jax.numpy as jnp
from jax import lax
from jax.experimental import pallas as pl
from jax.experimental.pallas import tpu as pltpu


def _pick_tile(dim, target):
    """Largest divisor of `dim` that is <= target (>=1)."""
    t = min(dim, max(1, target))
    while dim % t != 0:
        t -= 1
    return t


# ---------------------------------------------------------------------------
# Kernel 1: UpSample head — 1x1 conv (channel matmul) + bias + ReLU
# ---------------------------------------------------------------------------

def _conv1x1_relu_kernel(x_ref, w_ref, b_ref, o_ref):
    x = x_ref[...].astype(jnp.bfloat16)          # bf16 operands -> full-rate MXU
    acc = jnp.dot(x, w_ref[...], preferred_element_type=jnp.float32)
    o_ref[...] = jnp.maximum(acc + b_ref[...], 0.0).astype(o_ref.dtype)


def conv1x1_relu(x_flat, w_bf16, b, *, tile_m=512):
    # x_flat: (M, K) f32,  w_bf16: (K, N) bf16,  b: (N,) f32
    m, k = x_flat.shape
    n = w_bf16.shape[1]
    tm = min(tile_m, m)
    if tm < m:
        tm = max(8, (tm // 8) * 8)               # sublane-aligned M tile
    grid = (pl.cdiv(m, tm),)
    return pl.pallas_call(
        _conv1x1_relu_kernel,
        out_shape=jax.ShapeDtypeStruct((m, n), jnp.float32),
        grid_spec=pltpu.PrefetchScalarGridSpec(
            num_scalar_prefetch=0,
            grid=grid,
            in_specs=[
                pl.BlockSpec((tm, k), lambda i: (i, 0)),
                pl.BlockSpec((k, n), lambda i: (0, 0)),   # weight resident
                pl.BlockSpec((1, n), lambda i: (0, 0)),
            ],
            out_specs=pl.BlockSpec((tm, n), lambda i: (i, 0)),
        ),
        compiler_params=pltpu.CompilerParams(
            dimension_semantics=("parallel",),
            vmem_limit_bytes=48 * 1024 * 1024),
    )(x_flat, w_bf16, b.reshape(1, n))


# ---------------------------------------------------------------------------
# Kernel 2: fused relu(cat([up, BN(skip)])) + 3x3 conv + bias + ReLU + BN(out)
# ---------------------------------------------------------------------------

def _fused_cat_conv3x3_kernel(up_hbm, sk_hbm, wu_ref, ws_ref, b_ref,
                              sks_ref, skb_ref, cs_ref, cb_ref,
                              o_ref, up_buf, sk_buf, sems):
    """One (batch, H-tile) grid cell.

    The channel concat is never materialized: the 3x3 weight is pre-split
    along input channels into the `up` group and the `skip` group and both
    accumulate into the same accumulator. The 1-row conv halo is fetched by
    manual DMA; conv zero-padding at image borders is realized by masking."""
    n = pl.program_id(0)
    h = pl.program_id(1)
    nh = pl.num_programs(1)
    th = o_ref.shape[1]
    w = o_ref.shape[2]
    co = o_ref.shape[3]
    h0 = h * th

    # ---- halo'd tile DMA: image rows [h0-1, h0+th] -> buffer rows [0, th+1]
    cp_up = pltpu.make_async_copy(
        up_hbm.at[n, pl.ds(h0, th), :, :],
        up_buf.at[pl.ds(1, th), pl.ds(1, w), :], sems.at[0, 0])
    cp_sk = pltpu.make_async_copy(
        sk_hbm.at[n, pl.ds(h0, th), :, :],
        sk_buf.at[pl.ds(1, th), pl.ds(1, w), :], sems.at[1, 0])
    cp_up.start()
    cp_sk.start()

    @pl.when(h > 0)
    def _start_top():
        pltpu.make_async_copy(up_hbm.at[n, pl.ds(h0 - 1, 1), :, :],
                              up_buf.at[pl.ds(0, 1), pl.ds(1, w), :],
                              sems.at[0, 1]).start()
        pltpu.make_async_copy(sk_hbm.at[n, pl.ds(h0 - 1, 1), :, :],
                              sk_buf.at[pl.ds(0, 1), pl.ds(1, w), :],
                              sems.at[1, 1]).start()

    @pl.when(h < nh - 1)
    def _start_bot():
        pltpu.make_async_copy(up_hbm.at[n, pl.ds(h0 + th, 1), :, :],
                              up_buf.at[pl.ds(th + 1, 1), pl.ds(1, w), :],
                              sems.at[0, 2]).start()
        pltpu.make_async_copy(sk_hbm.at[n, pl.ds(h0 + th, 1), :, :],
                              sk_buf.at[pl.ds(th + 1, 1), pl.ds(1, w), :],
                              sems.at[1, 2]).start()

    cp_up.wait()
    cp_sk.wait()

    @pl.when(h > 0)
    def _wait_top():
        pltpu.make_async_copy(up_hbm.at[n, pl.ds(h0, 1), :, :],
                              up_buf.at[pl.ds(0, 1), pl.ds(1, w), :],
                              sems.at[0, 1]).wait()
        pltpu.make_async_copy(sk_hbm.at[n, pl.ds(h0, 1), :, :],
                              sk_buf.at[pl.ds(0, 1), pl.ds(1, w), :],
                              sems.at[1, 1]).wait()

    @pl.when(h < nh - 1)
    def _wait_bot():
        pltpu.make_async_copy(up_hbm.at[n, pl.ds(h0, 1), :, :],
                              up_buf.at[pl.ds(th + 1, 1), pl.ds(1, w), :],
                              sems.at[0, 2]).wait()
        pltpu.make_async_copy(sk_hbm.at[n, pl.ds(h0, 1), :, :],
                              sk_buf.at[pl.ds(th + 1, 1), pl.ds(1, w), :],
                              sems.at[1, 2]).wait()

    # ---- conv zero-padding mask (image borders only; halo rows are real) ---
    rows = lax.broadcasted_iota(jnp.int32, (th + 2, w + 2, 1), 0)
    cols = lax.broadcasted_iota(jnp.int32, (th + 2, w + 2, 1), 1)
    valid = ((rows >= 1) | (h > 0)) & ((rows <= th) | (h < nh - 1))
    valid = valid & (cols >= 1) & (cols <= w)

    # fused "relu(cat([up, bn(skip)]))" — no concatenate, no HBM intermediate
    up_a = jnp.where(valid, jnp.maximum(up_buf[...], 0.0), 0.0)
    sk_a = jnp.where(
        valid,
        jnp.maximum(sk_buf[...] * sks_ref[...] + skb_ref[...], 0.0),
        0.0)
    up_b = up_a.astype(jnp.bfloat16)             # bf16 MXU operands
    sk_b = sk_a.astype(jnp.bfloat16)
    wu = wu_ref[...]                             # (9, Cup, Cout) bf16
    ws = ws_ref[...]                             # (9, Cskip, Cout) bf16

    # ---- 3x3 conv as 9 shifted matmuls; accumulator bounded by the H tile --
    acc = jnp.zeros((th * w, co), jnp.float32)
    for dy in range(3):
        for dx in range(3):
            t = dy * 3 + dx
            pu = up_b[dy:dy + th, dx:dx + w, :].reshape(th * w, -1)
            ps = sk_b[dy:dy + th, dx:dx + w, :].reshape(th * w, -1)
            acc = acc + jnp.dot(pu, wu[t], preferred_element_type=jnp.float32)
            acc = acc + jnp.dot(ps, ws[t], preferred_element_type=jnp.float32)

    y = jnp.maximum(acc + b_ref[...], 0.0)       # ConvBlock ReLU
    y = y * cs_ref[...] + cb_ref[...]            # ConvBlock BatchNorm (eval)
    o_ref[...] = y.reshape(1, th, w, co).astype(o_ref.dtype)


def fused_cat_conv3x3_bn(up, skip, w3, b3, sk_scale, sk_shift,
                         out_scale, out_shift, *, tile_h_target=8):
    # up: (N, H, W, Cup) f32   skip: (N, H, W, Cskip) f32
    # w3: (3, 3, Cup+Cskip, Cout) f32
    n, hh, ww, cu = up.shape
    cs = skip.shape[-1]
    co = w3.shape[-1]
    assert w3.shape[2] == cu + cs
    th = _pick_tile(hh, tile_h_target)
    nh = hh // th

    # split the 3x3 weight along input channels (cat order: up first, skip next)
    w_up = w3[:, :, :cu, :].reshape(9, cu, co).astype(jnp.bfloat16)
    w_sk = w3[:, :, cu:, :].reshape(9, cs, co).astype(jnp.bfloat16)

    return pl.pallas_call(
        _fused_cat_conv3x3_kernel,
        out_shape=jax.ShapeDtypeStruct((n, hh, ww, co), jnp.float32),
        grid_spec=pltpu.PrefetchScalarGridSpec(
            num_scalar_prefetch=0,
            grid=(n, nh),
            in_specs=[
                pl.BlockSpec(memory_space=pl.ANY),       # up   (HBM, manual DMA)
                pl.BlockSpec(memory_space=pl.ANY),       # skip (HBM, manual DMA)
                pl.BlockSpec((9, cu, co), lambda i, j: (0, 0, 0)),  # resident
                pl.BlockSpec((9, cs, co), lambda i, j: (0, 0, 0)),  # resident
                pl.BlockSpec((1, co), lambda i, j: (0, 0)),
                pl.BlockSpec((1, cs), lambda i, j: (0, 0)),
                pl.BlockSpec((1, cs), lambda i, j: (0, 0)),
                pl.BlockSpec((1, co), lambda i, j: (0, 0)),
                pl.BlockSpec((1, co), lambda i, j: (0, 0)),
            ],
            out_specs=pl.BlockSpec((1, th, ww, co), lambda i, j: (i, j, 0, 0)),
            scratch_shapes=[
                pltpu.VMEM((th + 2, ww + 2, cu), jnp.float32),  # up tile + halo
                pltpu.VMEM((th + 2, ww + 2, cs), jnp.float32),  # skip tile + halo
                pltpu.SemaphoreType.DMA((2, 3)),
            ],
        ),
        compiler_params=pltpu.CompilerParams(
            dimension_semantics=("parallel", "parallel"),
            vmem_limit_bytes=48 * 1024 * 1024),
    )(up, skip, w_up, w_sk,
      b3.reshape(1, co), sk_scale.reshape(1, cs), sk_shift.reshape(1, cs),
      out_scale.reshape(1, co), out_shift.reshape(1, co))


# ---------------------------------------------------------------------------
# UnetUpBlock forward (glue in plain JAX, hot paths in Pallas)
# ---------------------------------------------------------------------------

def unet_up_block_forward(params, x_direct, x_skip):
    """x_direct: (N, Cd, Hd, Wd) NCHW, x_skip: (N, Cs, Hs, Ws) NCHW."""
    eps = 1e-5
    xd = jnp.transpose(x_direct, (0, 2, 3, 1)).astype(jnp.float32)  # NHWC
    xs = jnp.transpose(x_skip, (0, 2, 3, 1)).astype(jnp.float32)    # NHWC
    n, hd, wd, cd = xd.shape
    cout = params["up_conv_w"].shape[1] // 4

    # --- UpSample head: 1x1 conv + ReLU (tiled Pallas matmul, bf16 MXU) ---
    flat = xd.reshape(n * hd * wd, cd)
    y = conv1x1_relu(flat, params["up_conv_w"].astype(jnp.bfloat16),
                     params["up_conv_b"])                  # (N*Hd*Wd, 4*Cout)

    # PixelShuffle(2) + optional blur (pure data movement; plain JAX/XLA).
    # TODO(synk): folding the shuffle/blur into the Pallas kernels would save
    #             two more HBM passes over the (N, 2H, 2W, Cout) activation.
    y = y.reshape(n, hd, wd, cout, 2, 2)
    y = jnp.transpose(y, (0, 1, 4, 2, 5, 3))               # N, Hd, 2, Wd, 2, C
    up = y.reshape(n, 2 * hd, 2 * wd, cout)                # PixelShuffle(2)
    if params["blur"]:
        # ReplicationPad2d((1,0,1,0)) + AvgPool2d(2, stride=1)
        xp = jnp.pad(up, ((0, 0), (1, 0), (1, 0), (0, 0)), mode="edge")
        up = 0.25 * (xp[:, :-1, :-1, :] + xp[:, 1:, :-1, :]
                     + xp[:, :-1, 1:, :] + xp[:, 1:, 1:, :])

    # F.interpolate(mode='nearest') fallback if spatial shapes mismatch
    if up.shape[1:3] != xs.shape[1:3]:
        up = jax.image.resize(up, (n, xs.shape[1], xs.shape[2], cout),
                              method="nearest")

    # --- fused relu(cat) + 3x3 conv + ReLU + BN(out), one Pallas kernel ---
    sk_scale = params["bn_skip_gamma"] / jnp.sqrt(params["bn_skip_var"] + eps)
    sk_shift = params["bn_skip_beta"] - params["bn_skip_mean"] * sk_scale
    c_scale = params["bn_out_gamma"] / jnp.sqrt(params["bn_out_var"] + eps)
    c_shift = params["bn_out_beta"] - params["bn_out_mean"] * c_scale

    out = fused_cat_conv3x3_bn(up, xs, params["conv3_w"], params["conv3_b"],
                               sk_scale, sk_shift, c_scale, c_shift)

    # TODO(synk): SelfAttention branch (self_attention=True) and spectral norm
    #             are not implemented (defaults are off / inference no-op).
    return jnp.transpose(out, (0, 3, 1, 2))                # back to NCHW


def init_params(key, c_direct, c_skip, c_out, blur=True):
    ks = jax.random.split(key, 10)
    c_in = c_out + c_skip
    return {
        "blur": blur,
        # UpSample 1x1 conv:  (Cd, 4*Cout) weight, (4*Cout,) bias
        "up_conv_w": 0.1 * jax.random.normal(ks[0], (c_direct, 4 * c_out), jnp.float32),
        "up_conv_b": 0.1 * jax.random.normal(ks[1], (4 * c_out,), jnp.float32),
        # BatchNorm2d(in_channels_skip), eval mode
        "bn_skip_gamma": 1.0 + 0.1 * jax.random.normal(ks[2], (c_skip,), jnp.float32),
        "bn_skip_beta": 0.1 * jax.random.normal(ks[3], (c_skip,), jnp.float32),
        "bn_skip_mean": 0.1 * jax.random.normal(ks[4], (c_skip,), jnp.float32),
        "bn_skip_var": 0.5 + jax.random.uniform(ks[5], (c_skip,), jnp.float32),
        # ConvBlock: 3x3 conv (kh, kw, Cin, Cout) + bias + BN(eval)
        "conv3_w": 0.1 * jax.random.normal(ks[6], (3, 3, c_in, c_out), jnp.float32),
        "conv3_b": 0.1 * jax.random.normal(ks[7], (c_out,), jnp.float32),
        "bn_out_gamma": 1.0 + 0.1 * jax.random.normal(ks[8], (c_out,), jnp.float32),
        "bn_out_beta": 0.1 * jax.random.normal(ks[9], (c_out,), jnp.float32),
        "bn_out_mean": jnp.zeros((c_out,), jnp.float32),
        "bn_out_var": jnp.ones((c_out,), jnp.float32),
    }


if __name__ == "__main__":
    key = jax.random.PRNGKey(0)
    k_p, k_xd, k_xs = jax.random.split(key, 3)

    C_DIRECT, C_SKIP, C_OUT = 4, 8, 8
    N, HD, WD = 2, 8, 8          # direct path spatial; upsampled x2 -> 16x16
    HS, WS = 16, 16              # skip path spatial

    params = init_params(k_p, C_DIRECT, C_SKIP, C_OUT, blur=True)
    x_direct = jax.random.normal(k_xd, (N, C_DIRECT, HD, WD), jnp.float32)  # NCHW
    x_skip = jax.random.normal(k_xs, (N, C_SKIP, HS, WS), jnp.float32)      # NCHW

    out = unet_up_block_forward(params, x_direct, x_skip)
    out = jax.block_until_ready(out)
    assert out.shape == (N, C_OUT, HS, WS), out.shape
    assert bool(jnp.all(jnp.isfinite(out))), "non-finite values in output"
    print("KERNEL_OK")
</pallas_src>

<mosaic_0001>
module attributes {stable_mosaic.version = 11 : i64} {
  func.func @_conv1x1_relu_kernel(%arg0: i32, %arg1: memref<128x4xf32, #tpu.memory_space<vmem>>, %arg2: memref<4x32xbf16, #tpu.memory_space<vmem>>, %arg3: memref<1x32xf32, #tpu.memory_space<vmem>>, %arg4: memref<128x32xf32, #tpu.memory_space<vmem>>) attributes {dimension_semantics = [#tpu.dimension_semantics<parallel>], iteration_bounds = array<i64: 1>, scalar_prefetch = 0 : i64, scratch_operands = 0 : i64, tpu.core_type = #tpu.core_type<tc>, window_params = [{transform_indices = @transform_0, window_bounds = array<i64: 128, 4>}, {pipeline_mode = #tpu.pipeline_mode<synchronous>, transform_indices = @transform_1, window_bounds = array<i64: 4, 32>}, {pipeline_mode = #tpu.pipeline_mode<synchronous>, transform_indices = @transform_2, window_bounds = array<i64: 1, 32>}, {transform_indices = @transform_3, window_bounds = array<i64: 128, 32>}]} {
    %c0 = arith.constant 0 : index
    %c0_0 = arith.constant 0 : index
    %0 = vector.load %arg1[%c0, %c0_0] : memref<128x4xf32, #tpu.memory_space<vmem>>, vector<128x4xf32>
    %1 = arith.truncf %0 : vector<128x4xf32> to vector<128x4xbf16>
    %c0_1 = arith.constant 0 : index
    %c0_2 = arith.constant 0 : index
    %2 = vector.load %arg2[%c0_1, %c0_2] : memref<4x32xbf16, #tpu.memory_space<vmem>>, vector<4x32xbf16>
    %cst = arith.constant dense<0.000000e+00> : vector<128x32xf32>
    %3 = tpu.matmul %1, %2, %cst {dimension_numbers = #tpu.dot_dimension_numbers<[1], [0], [0], [1], [0, 0, 1, 1], [], []>} : vector<128x4xbf16>, vector<4x32xbf16>, vector<128x32xf32> -> vector<128x32xf32>
    %c0_3 = arith.constant 0 : index
    %c0_4 = arith.constant 0 : index
    %4 = vector.load %arg3[%c0_3, %c0_4] : memref<1x32xf32, #tpu.memory_space<vmem>>, vector<1x32xf32>
    %5 = vector.broadcast %4 : vector<1x32xf32> to vector<128x32xf32>
    %6 = arith.addf %3, %5 : vector<128x32xf32>
    %cst_5 = arith.constant 0.000000e+00 : f32
    %7 = vector.broadcast %cst_5 : f32 to vector<128x32xf32>
    %8 = arith.maximumf %6, %7 : vector<128x32xf32>
    %c0_6 = arith.constant 0 : index
    %c0_7 = arith.constant 0 : index
    %9 = vector.load %arg4[%c0_6, %c0_7] : memref<128x32xf32, #tpu.memory_space<vmem>>, vector<128x32xf32>
    tpu.vector_store %arg4[%c0_6, %c0_7], %8 {strides = array<i32>} : memref<128x32xf32, #tpu.memory_space<vmem>>, vector<128x32xf32>,
    return
  }
  func.func @transform_0(%arg0: i32) -> (i32, i32) {
    %c0_i32 = arith.constant 0 : i32
    %c0_i32_0 = arith.constant 0 : i32
    return %arg0, %c0_i32 : i32, i32
  }
  func.func @transform_1(%arg0: i32) -> (i32, i32) {
    %c0_i32 = arith.constant 0 : i32
    %c0_i32_0 = arith.constant 0 : i32
    %c0_i32_1 = arith.constant 0 : i32
    return %c0_i32, %c0_i32_0 : i32, i32
  }
  func.func @transform_2(%arg0: i32) -> (i32, i32) {
    %c0_i32 = arith.constant 0 : i32
    %c0_i32_0 = arith.constant 0 : i32
    %c0_i32_1 = arith.constant 0 : i32
    return %c0_i32, %c0_i32_0 : i32, i32
  }
  func.func @transform_3(%arg0: i32) -> (i32, i32) {
    %c0_i32 = arith.constant 0 : i32
    %c0_i32_0 = arith.constant 0 : i32
    return %arg0, %c0_i32 : i32, i32
  }
}

</mosaic_0001>

<llo_original>
// kernel: tpu_custom_call.1
$region0: #{tpu_custom_call.1}
  #allocation0 [shape = 'u32[]', space=smem, size = 0x4, offset = 0x4, fixed_abs, tag = 'smem constant byte address 0x4 - core index']
  #allocation1 [shape = 'u32[144,128]{1,0:T(1,128)}', space=vmem, size = 0x12000, scoped, tag = 'internal scratch']
  %s0 = inlined_call_operand.vmem [shape: f32[128,4], index: 0, kind: input, shape index: {}]
  %s1 = inlined_call_operand.vmem [shape: bf16[4,32], index: 1, kind: input, shape index: {}]
  %s2 = inlined_call_operand.vmem [shape: f32[1,32], index: 2, kind: input, shape index: {}]
  %s3 = inlined_call_operand.vmem [shape: f32[128,32], index: 3, kind: output, shape index: {}]
  %s4 = sld [smem:[#allocation0]]
  $region22: #{tpu_custom_call.1} parent=0
    _
  %s6 = ssub.s32 1, %s4
  %s7 = scalar_select 0, %s6, %s4
  // Predicated region
  $region2: #{tpu_custom_call.1} parent=0 // pred_check
    _
  $region3: #{tpu_custom_call.1} parent=0 // pred_check_branch
    %9 = sbr.rel (0) target = $region5
  $region4: #{tpu_custom_call.1} parent=0 // pred_region
    _
  $region5: #{tpu_custom_call.1} parent=0 // pred_fallthru
    _
  // Predicated region
  $region6: #{tpu_custom_call.1} parent=0 // pred_check
    _
  $region7: #{tpu_custom_call.1} parent=0 // pred_check_branch
    %11 = sbr.rel (0) target = $region9
  $region8: #{tpu_custom_call.1} parent=0 // pred_region
    _
  $region9: #{tpu_custom_call.1} parent=0 // pred_fallthru
    _
  // Predicated region
  $region10: #{tpu_custom_call.1} parent=0 // pred_check
    _
  $region11: #{tpu_custom_call.1} parent=0 // pred_check_branch
    %13 = sbr.rel (0) target = $region13
  $region12: #{tpu_custom_call.1} parent=0 // pred_region
    _
  $region13: #{tpu_custom_call.1} parent=0 // pred_fallthru
    _
  %v15 = vld [vmem:[%s0] sm:$0xff]
  %v16 = vld [vmem:[%s0 + $0x8] sm:$0xff]
  %v17 = vld [vmem:[%s0 + $0x10] sm:$0xff]
  %v18 = vld [vmem:[%s0 + $0x18] sm:$0xff]
  %v19 = vld [vmem:[%s0 + $0x20] sm:$0xff]
  %v20 = vld [vmem:[%s0 + $0x28] sm:$0xff]
  %v21 = vld [vmem:[%s0 + $0x30] sm:$0xff]
  %v22 = vld [vmem:[%s0 + $0x38] sm:$0xff]
  %v23 = vld [vmem:[%s0 + $0x40] sm:$0xff]
  %v24 = vld [vmem:[%s0 + $0x48] sm:$0xff]
  %v25 = vld [vmem:[%s0 + $0x50] sm:$0xff]
  %v26 = vld [vmem:[%s0 + $0x58] sm:$0xff]
  %v27 = vld [vmem:[%s0 + $0x60] sm:$0xff]
  %v28 = vld [vmem:[%s0 + $0x68] sm:$0xff]
  %v29 = vld [vmem:[%s0 + $0x70] sm:$0xff]
  %v30 = vld [vmem:[%s0 + $0x78] sm:$0xff]
  %v31 = vpack.c.bf16 %v16, %v15
  %v32 = vpack.c.bf16 %v18, %v17
  %v33 = vpack.c.bf16 %v20, %v19
  %v34 = vpack.c.bf16 %v22, %v21
  %v35 = vpack.c.bf16 %v24, %v23
  %v36 = vpack.c.bf16 %v26, %v25
  %v37 = vpack.c.bf16 %v28, %v27
  %v38 = vpack.c.bf16 %v30, %v29
  %v39 = vld [vmem:[%s1] sm:$0x3]
  %v40 = vld [vmem:[%s2] sm:$0x1]
  %v42 = vlaneseq
  %v43 = vshrl.u32 %v42, 7
  %v44 = vsub.s32 0, %v43
  %v45 = vrot.slane %v40, %v44
  %vm47 = vcmask 31744
  %v49 = vsel %vm47, %v31, 0
  %v52 = vsel %vm47, %v32, 0
  %v55 = vsel %vm47, %v33, 0
  %v58 = vsel %vm47, %v34, 0
  %v61 = vsel %vm47, %v35, 0
  %v64 = vsel %vm47, %v36, 0
  %v67 = vsel %vm47, %v37, 0
  %v70 = vsel %vm47, %v38, 0
  %vm72 = vcmask 1041408
  %v74 = vsel %vm72, %v39, 0
  %76 = vmatprep.subr.bf16.mxu0 0
  %77 = vmatpush1.bf16.msra.mxu0 %v74
  %78 = vmatprep.subr.bf16.mxu0 0
  %79 = vmatpush1.bf16.msra.mxu0 0
  %80 = vmatprep.subr.bf16.mxu0 0
  %81 = vmatpush1.bf16.msra.mxu0 0
  %82 = vmatprep.subr.bf16.mxu0 0
  %83 = vmatpush1.bf16.msra.mxu0 0
  %84 = vmatprep.subr.bf16.mxu0 0
  %85 = vmatpush1.bf16.msra.mxu0 0
  %86 = vmatprep.subr.bf16.mxu0 0
  %87 = vmatpush1.bf16.msra.mxu0 0
  %88 = vmatprep.subr.bf16.mxu0 0
  %89 = vmatpush1.bf16.msra.mxu0 0
  %90 = vmatprep.subr.bf16.mxu0 0
  %91 = vmatpush1.bf16.msra.mxu0 0
  %92 = vmatprep.subr.bf16.mxu0 0
  %93 = vmatpush1.bf16.msra.mxu0 0
  %94 = vmatprep.subr.bf16.mxu0 0
  %95 = vmatpush1.bf16.msra.mxu0 0
  %96 = vmatprep.subr.bf16.mxu0 0
  %97 = vmatpush1.bf16.msra.mxu0 0
  %98 = vmatprep.subr.bf16.mxu0 0
  %99 = vmatpush1.bf16.msra.mxu0 0
  %100 = vmatprep.subr.bf16.mxu0 0
  %101 = vmatpush1.bf16.msra.mxu0 0
  %102 = vmatprep.subr.bf16.mxu0 0
  %103 = vmatpush1.bf16.msra.mxu0 0
  %104 = vmatprep.subr.bf16.mxu0 0
  %105 = vmatpush1.bf16.msra.mxu0 0
  %106 = vmatprep.subr.bf16.mxu0 0
  %107 = vmatpush1.bf16.msra.mxu0 0
  %108 = vmatprep.mubr.bf16.mxu0 0
  %109 = vmatmul.mubr.bf16.gmra.mrb[0].mxu0 %v49
  %v110 = vpop.f32.mrb[0].mxu0
  %v111 = vadd.f32 %v45, %v110
  %v112 = vpop.f32.mrb[0].mxu0
  %v113 = vpop.f32.mrb[0].mxu0
  %v114 = vadd.f32 %v45, %v113
  %v115 = vpop.f32.mrb[0].mxu0
  %116 = vmatprep.mubr.bf16.mxu0 0
  %117 = vmatmul.mubr.bf16.gmra.mrb[0].mxu0 %v52
  %v118 = vpop.f32.mrb[0].mxu0
  %v119 = vadd.f32 %v45, %v118
  %v120 = vpop.f32.mrb[0].mxu0
  %v121 = vpop.f32.mrb[0].mxu0
  %v122 = vadd.f32 %v45, %v121
  %v123 = vpop.f32.mrb[0].mxu0
  %124 = vmatprep.mubr.bf16.mxu0 0
  %125 = vmatmul.mubr.bf16.gmra.mrb[0].mxu0 %v55
  %v126 = vpop.f32.mrb[0].mxu0
  %v127 = vadd.f32 %v45, %v126
  %v128 = vpop.f32.mrb[0].mxu0
  %v129 = vpop.f32.mrb[0].mxu0
  %v130 = vadd.f32 %v45, %v129
  %v131 = vpop.f32.mrb[0].mxu0
  %132 = vmatprep.mubr.bf16.mxu0 0
  %133 = vmatmul.mubr.bf16.gmra.mrb[0].mxu0 %v58
  %v134 = vpop.f32.mrb[0].mxu0
  %v135 = vadd.f32 %v45, %v134
  %v136 = vpop.f32.mrb[0].mxu0
  %v137 = vpop.f32.mrb[0].mxu0
  %v138 = vadd.f32 %v45, %v137
  %v139 = vpop.f32.mrb[0].mxu0
  %140 = vmatprep.mubr.bf16.mxu0 0
  %141 = vmatmul.mubr.bf16.gmra.mrb[0].mxu0 %v61
  %v142 = vpop.f32.mrb[0].mxu0
  %v143 = vadd.f32 %v45, %v142
  %v144 = vpop.f32.mrb[0].mxu0
  %v145 = vpop.f32.mrb[0].mxu0
  %v146 = vadd.f32 %v45, %v145
  %v147 = vpop.f32.mrb[0].mxu0
  %148 = vmatprep.mubr.bf16.mxu0 0
  %149 = vmatmul.mubr.bf16.gmra.mrb[0].mxu0 %v64
  %v150 = vpop.f32.mrb[0].mxu0
  %v151 = vadd.f32 %v45, %v150
  %v152 = vpop.f32.mrb[0].mxu0
  %v153 = vpop.f32.mrb[0].mxu0
  %v154 = vadd.f32 %v45, %v153
  %v155 = vpop.f32.mrb[0].mxu0
  %156 = vmatprep.mubr.bf16.mxu0 0
  %157 = vmatmul.mubr.bf16.gmra.mrb[0].mxu0 %v67
  %v158 = vpop.f32.mrb[0].mxu0
  %v159 = vadd.f32 %v45, %v158
  %v160 = vpop.f32.mrb[0].mxu0
  %v161 = vpop.f32.mrb[0].mxu0
  %v162 = vadd.f32 %v45, %v161
  %v163 = vpop.f32.mrb[0].mxu0
  %164 = vmatprep.mubr.bf16.mxu0 0
  %165 = vmatmul.mubr.bf16.gmra.mrb[0].mxu0 %v70
  %v166 = vpop.f32.mrb[0].mxu0
  %v167 = vadd.f32 %v45, %v166
  %v168 = vpop.f32.mrb[0].mxu0
  %v169 = vpop.f32.mrb[0].mxu0
  %v170 = vadd.f32 %v45, %v169
  %v171 = vpop.f32.mrb[0].mxu0
  %172 = vdwg.mxu0
  %v173 = vmax.f32 %v111, 0.0
  %v174 = vmax.f32 %v114, 0.0
  %v175 = vmax.f32 %v119, 0.0
  %v176 = vmax.f32 %v122, 0.0
  %v177 = vmax.f32 %v127, 0.0
  %v178 = vmax.f32 %v130, 0.0
  %v179 = vmax.f32 %v135, 0.0
  %v180 = vmax.f32 %v138, 0.0
  %v181 = vmax.f32 %v143, 0.0
  %v182 = vmax.f32 %v146, 0.0
  %v183 = vmax.f32 %v151, 0.0
  %v184 = vmax.f32 %v154, 0.0
  %v185 = vmax.f32 %v159, 0.0
  %v186 = vmax.f32 %v162, 0.0
  %v187 = vmax.f32 %v167, 0.0
  %v188 = vmax.f32 %v170, 0.0
  %vm189 = vcmask 261120
  %190 = vst.msk [vmem:[%s3] sm:$0xff] %vm189, %v173
  %191 = vst.msk [vmem:[%s3 + $0x8] sm:$0xff] %vm189, %v174
  %192 = vst.msk [vmem:[%s3 + $0x10] sm:$0xff] %vm189, %v175
  %193 = vst.msk [vmem:[%s3 + $0x18] sm:$0xff] %vm189, %v176
  %194 = vst.msk [vmem:[%s3 + $0x20] sm:$0xff] %vm189, %v177
  %195 = vst.msk [vmem:[%s3 + $0x28] sm:$0xff] %vm189, %v178
  %196 = vst.msk [vmem:[%s3 + $0x30] sm:$0xff] %vm189, %v179
  %197 = vst.msk [vmem:[%s3 + $0x38] sm:$0xff] %vm189, %v180
  %198 = vst.msk [vmem:[%s3 + $0x40] sm:$0xff] %vm189, %v181
  %199 = vst.msk [vmem:[%s3 + $0x48] sm:$0xff] %vm189, %v182
  %200 = vst.msk [vmem:[%s3 + $0x50] sm:$0xff] %vm189, %v183
  %201 = vst.msk [vmem:[%s3 + $0x58] sm:$0xff] %vm189, %v184
  %202 = vst.msk [vmem:[%s3 + $0x60] sm:$0xff] %vm189, %v185
  %203 = vst.msk [vmem:[%s3 + $0x68] sm:$0xff] %vm189, %v186
  %204 = vst.msk [vmem:[%s3 + $0x70] sm:$0xff] %vm189, %v187
  %205 = vst.msk [vmem:[%s3 + $0x78] sm:$0xff] %vm189, %v188
  // Predicated region
  $region14: #{tpu_custom_call.1} parent=0 // pred_check
    _
  $region15: #{tpu_custom_call.1} parent=0 // pred_check_branch
    %207 = sbr.rel (0) target = $region17
  $region16: #{tpu_custom_call.1} parent=0 // pred_region
    _
  $region17: #{tpu_custom_call.1} parent=0 // pred_fallthru
    _
  // Predicated region
  $region18: #{tpu_custom_call.1} parent=0 // pred_check
    _
  $region19: #{tpu_custom_call.1} parent=0 // pred_check_branch
    %209 = sbr.rel (0) target = $region21
  $region20: #{tpu_custom_call.1} parent=0 // pred_region
    _
  $region21: #{tpu_custom_call.1} parent=0 // pred_fallthru
    _

</llo_original>
